<compile_context>
chip_gen: v6e
topology: v6e:2x2x1
jax: 0.10.0
libtpu: 0.0.40
codegen_flags: <defaults>
</compile_context>

<pallas_src>
import jax
import jax.numpy as jnp
from jax.experimental import pallas as pl
from jax.experimental.pallas import tpu as pltpu

EPS = 1e-6  # LayerNormalization epsilon


def residual_connection_kernel(alpha_ref, x_ref, w_ref, b_ref, o_ref):
    # x_ref: (TM, D) f32 tile; w_ref: (D, D) bf16 (resident); b_ref: (1, D) f32
    # (resident, beta pre-folded); alpha_ref: scalar in SMEM.
    x = x_ref[...].astype(jnp.float32)
    n = x.shape[-1]

    # --- LayerNormalization (scalar affine, unbiased std like torch.std) ---
    # Two independent cross-lane reductions (can overlap on the XLUs).
    s1 = jnp.sum(x, axis=-1, keepdims=True)
    s2 = jnp.sum(x * x, axis=-1, keepdims=True)
    mean = s1 * (1.0 / n)
    var = (s2 - n * (mean * mean)) * (1.0 / (n - 1))  # unbiased (ddof=1)
    var = jnp.maximum(var, 0.0)                        # guard f32 cancellation
    std = jnp.sqrt(var)
    scale = alpha_ref[0] / (std + EPS)  # exact divide on a (TM,1) column: cheap
    y = (x - mean) * scale              # beta folded into b_ref on the host

    # --- sublayer: Linear(D, D) on the MXU (bf16 operands, f32 accumulate) ---
    sub = jnp.dot(y.astype(jnp.bfloat16), w_ref[...],
                  preferred_element_type=jnp.float32)
    sub = sub + b_ref[...]

    # --- dropout (eval mode => identity) + residual add (original f32 x) ---
    o_ref[...] = (x + sub).astype(o_ref.dtype)


def _round_up(x: int, m: int) -> int:
    return (x + m - 1) // m * m


def _pick_row_tile(rows: int, max_tm: int = 512) -> int:
    """Fixed large row tile, but keep ~>=8 grid steps so the pipeline overlaps."""
    target = rows // 8                     # aim for >= ~8 grid steps
    target = max(8, (target // 8) * 8)     # sublane alignment, floor 8
    return min(max_tm, target)


def _resident_spec(block_shape):
    """Constant-index VMEM-resident operand; single pipeline buffer if supported."""
    idx = lambda i: (0,) * len(block_shape)
    try:
        return pl.BlockSpec(block_shape, idx, pipeline_mode=pl.Buffered(1))
    except (AttributeError, TypeError):
        return pl.BlockSpec(block_shape, idx)


def residual_connection(x, w, b, alpha, beta, *, tm=None, interpret=False):
    """x: [B, S, D] f32; w: [D, D]; b: [D]; alpha/beta: scalar params [1]."""
    B, S, D = x.shape
    rows = B * S
    assert D % 128 == 0, "hidden dim D must be a multiple of 128 (lane-dense)"
    assert D >= 2, "unbiased std needs D >= 2"

    if tm is None:
        tm = _pick_row_tile(rows)
    tm = max(8, (tm // 8) * 8)

    # Pad rows to a multiple of tm (fixed-size blocks, no degenerate tiles).
    rows_pad = _round_up(rows, tm)
    x2 = x.reshape(rows, D).astype(jnp.float32)
    if rows_pad != rows:
        x2 = jnp.pad(x2, ((0, rows_pad - rows), (0, 0)))

    w_bf16 = w.astype(jnp.bfloat16)  # halves W footprint, bf16 MXU path
    # Fold LayerNorm beta into the linear bias: (y + beta) @ W + b
    #   == y @ W + (b + beta * W.sum(axis=0))
    b_eff = (b.astype(jnp.float32)
             + beta.astype(jnp.float32)[0] * jnp.sum(w.astype(jnp.float32), axis=0))
    b2 = b_eff.reshape(1, D)
    alpha1 = alpha.astype(jnp.float32).reshape(1)

    grid = (rows_pad // tm,)

    # VMEM footprint: double-buffered x/out tiles, single-buffered W and bias.
    vmem_bytes = (2 * tm * D * 4      # x tile (f32), 2 buffers
                  + 2 * tm * D * 4    # out tile (f32), 2 buffers
                  + 1 * D * D * 2     # W (bf16), 1 buffer
                  + 1 * D * 4)        # bias (f32)
    vmem_limit = int(min(100 << 20, max(32 << 20, 1.5 * vmem_bytes + (4 << 20))))

    cost = pl.CostEstimate(
        flops=2 * rows_pad * D * D + 10 * rows_pad * D,
        transcendentals=rows_pad,  # sqrt per row
        bytes_accessed=rows_pad * D * 4 * 2 + D * D * 2 + D * 4,
    )

    out = pl.pallas_call(
        residual_connection_kernel,
        out_shape=jax.ShapeDtypeStruct((rows_pad, D), x.dtype),
        grid=grid,
        in_specs=[
            pl.BlockSpec(memory_space=pltpu.SMEM),     # alpha (scalar)
            pl.BlockSpec((tm, D), lambda i: (i, 0)),   # x row tile (pipelined)
            _resident_spec((D, D)),                    # W (VMEM-resident)
            _resident_spec((1, D)),                    # bias (VMEM-resident)
        ],
        out_specs=pl.BlockSpec((tm, D), lambda i: (i, 0)),
        compiler_params=pltpu.CompilerParams(
            dimension_semantics=("parallel",),
            vmem_limit_bytes=vmem_limit,
        ),
        cost_estimate=cost,
        interpret=interpret,
    )(alpha1, x2, w_bf16, b2)

    return out[:rows].reshape(B, S, D)


def reference(x, w, b, alpha, beta):
    mean = jnp.mean(x, axis=-1, keepdims=True)
    std = jnp.std(x, axis=-1, keepdims=True, ddof=1)
    y = alpha[0] * (x - mean) / (std + EPS) + beta[0]
    sub = jnp.einsum("bsd,de->bse", y, w) + b
    return x + sub


if __name__ == "__main__":
    key = jax.random.PRNGKey(0)
    kx, kw, kb, kx2 = jax.random.split(key, 4)

    # Main case: lane-dense D, rows = 1024 -> tm = 128, grid = 8 (pipelined).
    B, S, D = 4, 256, 128
    x = jax.random.normal(kx, (B, S, D), dtype=jnp.float32)
    w = jax.random.normal(kw, (D, D), dtype=jnp.float32) / jnp.sqrt(D)
    b = jax.random.normal(kb, (D,), dtype=jnp.float32) * 0.01
    alpha = jnp.ones((1,), dtype=jnp.float32)   # LayerNormalization init
    beta = jnp.zeros((1,), dtype=jnp.float32)

    out = residual_connection(x, w, b, alpha, beta)
    jax.block_until_ready(out)
    ref = reference(x, w, b, alpha, beta)
    assert out.shape == (B, S, D)
    # bf16 matmul operands => small drift vs fp32 reference
    assert jnp.allclose(out, ref, atol=5e-2, rtol=5e-2), (
        float(jnp.max(jnp.abs(out - ref))))

    # Odd row count: exercises the host-side row padding + slice-back path.
    B2, S2 = 2, 100
    x_odd = jax.random.normal(kx2, (B2, S2, D), dtype=jnp.float32)
    out_odd = residual_connection(x_odd, w, b, alpha, beta)
    jax.block_until_ready(out_odd)
    ref_odd = reference(x_odd, w, b, alpha, beta)
    assert out_odd.shape == (B2, S2, D)
    assert jnp.allclose(out_odd, ref_odd, atol=5e-2, rtol=5e-2), (
        float(jnp.max(jnp.abs(out_odd - ref_odd))))

    print("KERNEL_OK")
</pallas_src>

<mosaic_0001>
module attributes {stable_mosaic.version = 11 : i64} {
  func.func @residual_connection_kernel(%arg0: i32, %arg1: memref<1xf32, #tpu.memory_space<smem>>, %arg2: memref<128x128xf32, #tpu.memory_space<vmem>>, %arg3: memref<128x128xbf16, #tpu.memory_space<vmem>>, %arg4: memref<1x128xf32, #tpu.memory_space<vmem>>, %arg5: memref<128x128xf32, #tpu.memory_space<vmem>>) attributes {dimension_semantics = [#tpu.dimension_semantics<parallel>], iteration_bounds = array<i64: 8>, scalar_prefetch = 0 : i64, scratch_operands = 0 : i64, tpu.core_type = #tpu.core_type<tc>, window_params = [{transform_indices = @transform_0, window_bounds = array<i64: 1>}, {transform_indices = @transform_1, window_bounds = array<i64: 128, 128>}, {pipeline_mode = #tpu.pipeline_mode<synchronous>, transform_indices = @transform_2, window_bounds = array<i64: 128, 128>}, {pipeline_mode = #tpu.pipeline_mode<synchronous>, transform_indices = @transform_3, window_bounds = array<i64: 1, 128>}, {transform_indices = @transform_4, window_bounds = array<i64: 128, 128>}]} {
    %c0 = arith.constant 0 : index
    %c0_0 = arith.constant 0 : index
    %0 = vector.load %arg2[%c0, %c0_0] : memref<128x128xf32, #tpu.memory_space<vmem>>, vector<128x128xf32>
    %cst = arith.constant dense<0.000000e+00> : vector<128xf32>
    %1 = vector.multi_reduction <add>, %0, %cst [1] : vector<128x128xf32> to vector<128xf32>
    %2 = vector.shape_cast %1 : vector<128xf32> to vector<128x1xf32>
    %3 = arith.mulf %0, %0 : vector<128x128xf32>
    %cst_1 = arith.constant dense<0.000000e+00> : vector<128xf32>
    %4 = vector.multi_reduction <add>, %3, %cst_1 [1] : vector<128x128xf32> to vector<128xf32>
    %5 = vector.shape_cast %4 : vector<128xf32> to vector<128x1xf32>
    %cst_2 = arith.constant 7.812500e-03 : f32
    %6 = vector.broadcast %cst_2 : f32 to vector<128x1xf32>
    %7 = arith.mulf %2, %6 : vector<128x1xf32>
    %8 = arith.mulf %7, %7 : vector<128x1xf32>
    %cst_3 = arith.constant 1.280000e+02 : f32
    %9 = vector.broadcast %cst_3 : f32 to vector<128x1xf32>
    %10 = arith.mulf %9, %8 : vector<128x1xf32>
    %11 = arith.subf %5, %10 : vector<128x1xf32>
    %cst_4 = arith.constant 0.00787401571 : f32
    %12 = vector.broadcast %cst_4 : f32 to vector<128x1xf32>
    %13 = arith.mulf %11, %12 : vector<128x1xf32>
    %cst_5 = arith.constant 0.000000e+00 : f32
    %14 = vector.broadcast %cst_5 : f32 to vector<128x1xf32>
    %15 = arith.maximumf %13, %14 : vector<128x1xf32>
    %16 = math.sqrt %15 : vector<128x1xf32>
    %c0_6 = arith.constant 0 : index
    %17 = memref.load %arg1[%c0_6] : memref<1xf32, #tpu.memory_space<smem>>
    %cst_7 = arith.constant 9.99999997E-7 : f32
    %18 = vector.broadcast %cst_7 : f32 to vector<128x1xf32>
    %19 = arith.addf %16, %18 : vector<128x1xf32>
    %20 = vector.broadcast %17 : f32 to vector<128x1xf32>
    %21 = arith.divf %20, %19 : vector<128x1xf32>
    %22 = vector.broadcast %7 : vector<128x1xf32> to vector<128x128xf32>
    %23 = arith.subf %0, %22 : vector<128x128xf32>
    %24 = vector.broadcast %21 : vector<128x1xf32> to vector<128x128xf32>
    %25 = arith.mulf %23, %24 : vector<128x128xf32>
    %26 = arith.truncf %25 : vector<128x128xf32> to vector<128x128xbf16>
    %c0_8 = arith.constant 0 : index
    %c0_9 = arith.constant 0 : index
    %27 = vector.load %arg3[%c0_8, %c0_9] : memref<128x128xbf16, #tpu.memory_space<vmem>>, vector<128x128xbf16>
    %cst_10 = arith.constant dense<0.000000e+00> : vector<128x128xf32>
    %28 = tpu.matmul %26, %27, %cst_10 {dimension_numbers = #tpu.dot_dimension_numbers<[1], [0], [0], [1], [0, 0, 1, 1], [], []>} : vector<128x128xbf16>, vector<128x128xbf16>, vector<128x128xf32> -> vector<128x128xf32>
    %c0_11 = arith.constant 0 : index
    %c0_12 = arith.constant 0 : index
    %29 = vector.load %arg4[%c0_11, %c0_12] : memref<1x128xf32, #tpu.memory_space<vmem>>, vector<1x128xf32>
    %30 = vector.broadcast %29 : vector<1x128xf32> to vector<128x128xf32>
    %31 = arith.addf %28, %30 : vector<128x128xf32>
    %32 = arith.addf %0, %31 : vector<128x128xf32>
    %c0_13 = arith.constant 0 : index
    %c0_14 = arith.constant 0 : index
    %33 = vector.load %arg5[%c0_13, %c0_14] : memref<128x128xf32, #tpu.memory_space<vmem>>, vector<128x128xf32>
    tpu.vector_store %arg5[%c0_13, %c0_14], %32 {strides = array<i32>} : memref<128x128xf32, #tpu.memory_space<vmem>>, vector<128x128xf32>,
    return
  }
  func.func @transform_0(%arg0: i32) -> i32 {
    %c0_i32 = arith.constant 0 : i32
    %c0_i32_0 = arith.constant 0 : i32
    return %c0_i32 : i32
  }
  func.func @transform_1(%arg0: i32) -> (i32, i32) {
    %c0_i32 = arith.constant 0 : i32
    %c0_i32_0 = arith.constant 0 : i32
    return %arg0, %c0_i32 : i32, i32
  }
  func.func @transform_2(%arg0: i32) -> (i32, i32) {
    %c0_i32 = arith.constant 0 : i32
    %c0_i32_0 = arith.constant 0 : i32
    %c0_i32_1 = arith.constant 0 : i32
    return %c0_i32, %c0_i32_0 : i32, i32
  }
  func.func @transform_3(%arg0: i32) -> (i32, i32) {
    %c0_i32 = arith.constant 0 : i32
    %c0_i32_0 = arith.constant 0 : i32
    %c0_i32_1 = arith.constant 0 : i32
    return %c0_i32, %c0_i32_0 : i32, i32
  }
  func.func @transform_4(%arg0: i32) -> (i32, i32) {
    %c0_i32 = arith.constant 0 : i32
    %c0_i32_0 = arith.constant 0 : i32
    return %arg0, %c0_i32 : i32, i32
  }
}

</mosaic_0001>

<llo_original>
// kernel: tpu_custom_call.1
$region0: #{tpu_custom_call.1}
  #allocation0 [shape = 'u32[]', space=smem, size = 0x4, offset = 0x4, fixed_abs, tag = 'smem constant byte address 0x4 - core index']
  #allocation1 [shape = 'u32[144,128]{1,0:T(1,128)}', space=vmem, size = 0x12000, scoped, tag = 'internal scratch']
  #allocation2 [shape = 'f32[1]{0:T(128)S(6)}', space=smem, size = 0x200, scoped, tag = 'scoped memory for tpu_custom_call.1']
  %s0 = inlined_call_operand.<no memory space> [shape: f32[1], index: 0, kind: input, shape index: {}]
  %s1 = inlined_call_operand.hbm [shape: f32[1024,128], index: 1, kind: input, shape index: {}]
  %s2 = inlined_call_operand.hbm [shape: bf16[128,128], index: 2, kind: input, shape index: {}]
  %s3 = inlined_call_operand.vmem [shape: f32[1,128], index: 3, kind: input, shape index: {}]
  %s4 = inlined_call_operand.hbm [shape: f32[1024,128], index: 4, kind: output, shape index: {}]
  %s5 = sld [smem:[#allocation0]]
  $region57: #{tpu_custom_call.1} parent=0
    _
  %s7 = ssub.s32 1, %s5
  %s8 = scalar_select 0, %s7, %s5
  %9 = sst [smem:[#allocation2]] %s0
  $region1: #{tpu_custom_call.1} parent=0
    #allocation3 [shape = 'u8[131072]{0}', space=vmem, size = 0x20000, scoped, tag = 'input window, operand 1']
    #allocation4 [shape = 's32[2]{0}', space=sflag, size = 0x8, scoped, tag = 'scoped memory for tpu_custom_call.1']
    #allocation5 [shape = 's32[2]{0}', space=sflag, size = 0x8, scoped, tag = 'scoped memory for tpu_custom_call.1']
    #allocation6 [shape = 'u8[32768]{0}', space=vmem, size = 0x8000, scoped, tag = 'input window, operand 2, single buffered']
    #allocation7 [shape = 's32[1]{0}', space=sflag, size = 0x4, scoped, tag = 'scoped memory for tpu_custom_call.1']
    #allocation8 [shape = 'u8[131072]{0}', space=vmem, size = 0x20000, scoped, tag = 'output window, operand 0']
    %10 = vsyncpa [#allocation4], 0
    %s11 = scalar_lea.sflag [#allocation4], 1
    %12 = vsyncpa %s11, 0
    %13 = vsyncpa [#allocation7], 0
    %14 = vsyncpa [#allocation5], 0
    %s15 = scalar_lea.sflag [#allocation5], 1
    %16 = vsyncpa %s15, 0
    loop: start=0, step=1, limit=10
    $region2: #{tpu_custom_call.1} parent=1 // loop_pre_header
      _
    $region3: #{tpu_custom_call.1} parent=1 // loop_header
      %s18 = sphi 0, %s22
      %p19 = scmp.ge.s32.totalorder %s18, 10
      %s26 = sphi 0, %s26
      %s28 = sphi 0, %s26
      %s29 = sphi 0, %s28
      %s43 = sphi 0, %s29
      %s49 = sphi 0, %s51
      %s52 = sphi 0, %s49
      %s53 = sphi 0, %s52
      %s69 = sphi 0, %s53
      %s73 = sphi 0, %s73
      %s75 = sphi 0, %s73
      %s76 = sphi 0, %s75
      %s90 = sphi 0, %s76
      %s94 = sphi 0, %s94
      %s96 = sphi 0, %s94
      %s97 = sphi 0, %s96
      %s111 = sphi 0, %s97
      %s117 = sphi 0, %s119
      %s120 = sphi 0, %s117
      %s121 = sphi 0, %s120
      %s137 = sphi 0, %s121
    $region4: #{tpu_custom_call.1} parent=1 // loop_header_branch
      %21 = sbr.rel (%p19) target = $region8
    $region5: #{tpu_custom_call.1} parent=1 // loop_body
      %s23 = ssub.s32 %s18, 1
      %s24 = ssub.s32 %s18, 2
      %s25 = sadd.s32 %s18, 1
      %s27 = sadd.s32 %s26, 1
      %p30 = scmp.eq.s32.totalorder %s18, 7
      %p31 = scmp.ne.s32.totalorder %s26, %s28
      %p32 = scmp.eq.s32.totalorder %s18, 0
      %p33 = por %p31, %p32
      %p34 = scmp.ne.s32.totalorder %s26, %s28
      %p35 = scmp.eq.s32.totalorder %s23, 7
      %p36 = por %p34, %p35
      %p37 = scmp.ne.s32.totalorder %s28, %s29
      %p38 = scmp.eq.s32.totalorder %s23, 0
      %p39 = por %p37, %p38
      %p40 = scmp.ne.s32.totalorder %s28, %s29
      %p41 = scmp.eq.s32.totalorder %s24, 7
      %p42 = por %p40, %p41
      %p44 = scmp.ne.s32.totalorder %s29, %s43
      %p45 = scmp.eq.s32.totalorder %s24, 0
      %p46 = por %p44, %p45
      %s47 = ssub.s32 %s18, %s25
      %p48 = scmp.eq.s32.totalorder %s47, 0
      %s50 = sadd.s32 %s49, 1
      %s51 = scalar_select %p48, %s49, %s50
      %p54 = pneg %p48
      %p55 = scmp.eq.s32.totalorder %s18, 7
      %p56 = por %p54, %p55
      %p57 = scmp.ne.s32.totalorder %s49, %s52
      %p58 = scmp.eq.s32.totalorder %s18, 0
      %p59 = por %p57, %p58
      %p60 = scmp.ne.s32.totalorder %s49, %s52
      %p61 = scmp.eq.s32.totalorder %s23, 7
      %p62 = por %p60, %p61
      %p63 = scmp.ne.s32.totalorder %s52, %s53
      %p64 = scmp.eq.s32.totalorder %s23, 0
      %p65 = por %p63, %p64
      %p66 = scmp.ne.s32.totalorder %s52, %s53
      %p67 = scmp.eq.s32.totalorder %s24, 7
      %p68 = por %p66, %p67
      %p70 = scmp.ne.s32.totalorder %s53, %s69
      %p71 = scmp.eq.s32.totalorder %s24, 0
      %p72 = por %p70, %p71
      %s74 = sadd.s32 %s73, 1
      %p77 = scmp.eq.s32.totalorder %s18, 7
      %p78 = scmp.ne.s32.totalorder %s73, %s75
      %p79 = scmp.eq.s32.totalorder %s18, 0
      %p80 = por %p78, %p79
      %p81 = scmp.ne.s32.totalorder %s73, %s75
      %p82 = scmp.eq.s32.totalorder %s23, 7
      %p83 = por %p81, %p82
      %p84 = scmp.ne.s32.totalorder %s75, %s76
      %p85 = scmp.eq.s32.totalorder %s23, 0
      %p86 = por %p84, %p85
      %p87 = scmp.ne.s32.totalorder %s75, %s76
      %p88 = scmp.eq.s32.totalorder %s24, 7
      %p89 = por %p87, %p88
      %p91 = scmp.ne.s32.totalorder %s76, %s90
      %p92 = scmp.eq.s32.totalorder %s24, 0
      %p93 = por %p91, %p92
      %s95 = sadd.s32 %s94, 1
      %p98 = scmp.eq.s32.totalorder %s18, 7
      %p99 = scmp.ne.s32.totalorder %s94, %s96
      %p100 = scmp.eq.s32.totalorder %s18, 0
      %p101 = por %p99, %p100
      %p102 = scmp.ne.s32.totalorder %s94, %s96
      %p103 = scmp.eq.s32.totalorder %s23, 7
      %p104 = por %p102, %p103
      %p105 = scmp.ne.s32.totalorder %s96, %s97
      %p106 = scmp.eq.s32.totalorder %s23, 0
      %p107 = por %p105, %p106
      %p108 = scmp.ne.s32.totalorder %s96, %s97
      %p109 = scmp.eq.s32.totalorder %s24, 7
      %p110 = por %p108, %p109
      %p112 = scmp.ne.s32.totalorder %s97, %s111
      %p113 = scmp.eq.s32.totalorder %s24, 0
      %p114 = por %p112, %p113
      %s115 = ssub.s32 %s18, %s25
      %p116 = scmp.eq.s32.totalorder %s115, 0
      %s118 = sadd.s32 %s117, 1
      %s119 = scalar_select %p116, %s117, %s118
      %p122 = pneg %p116
      %p123 = scmp.eq.s32.totalorder %s18, 7
      %p124 = por %p122, %p123
      %p125 = scmp.ne.s32.totalorder %s117, %s120
      %p126 = scmp.eq.s32.totalorder %s18, 0
      %p127 = por %p125, %p126
      %p128 = scmp.ne.s32.totalorder %s117, %s120
      %p129 = scmp.eq.s32.totalorder %s23, 7
      %p130 = por %p128, %p129
      %p131 = scmp.ne.s32.totalorder %s120, %s121
      %p132 = scmp.eq.s32.totalorder %s23, 0
      %p133 = por %p131, %p132
      %p134 = scmp.ne.s32.totalorder %s120, %s121
      %p135 = scmp.eq.s32.totalorder %s24, 7
      %p136 = por %p134, %p135
      %p138 = scmp.ne.s32.totalorder %s121, %s137
      %p139 = scmp.eq.s32.totalorder %s24, 0
      %p140 = por %p138, %p139
      %p141 = scmp.le.s32.totalorder 1, %s18
      %p142 = scmp.lt.s32.totalorder %s18, 9
      %p143 = pnand %p141, %p142
      %p144 = pneg %p143
      // Predicated region
      $region9: #{tpu_custom_call.1} parent=5 // pred_check
        _
      $region10: #{tpu_custom_call.1} parent=5 // pred_check_branch
        %146 = sbr.rel (%p143) target = $region12
      $region11: #{tpu_custom_call.1} parent=5 // pred_region
        %s147 = ssub.s32 %s18, 1
        // Predicated region
        $region13: #{tpu_custom_call.1} parent=11 // pred_check
          %p148 = pneg %p39
        $region14: #{tpu_custom_call.1} parent=11 // pred_check_branch
          %150 = sbr.rel (%p148) target = $region16
        $region15: #{tpu_custom_call.1} parent=11 // pred_region
          _
        $region16: #{tpu_custom_call.1} parent=11 // pred_fallthru
          _
        // Predicated region
        $region17: #{tpu_custom_call.1} parent=11 // pred_check
          %p151 = pneg %p86
        $region18: #{tpu_custom_call.1} parent=11 // pred_check_branch
          %153 = sbr.rel (%p151) target = $region20
        $region19: #{tpu_custom_call.1} parent=11 // pred_region
          %s155 = ssub.s32 1024, 1024
          %156 = vsyncadd [#allocation7], %s155
          %s157 = sshll.u32 [#allocation6], 4
          %s158 = int_to_ptr.vmem [resolvable:$true] %s157
          %163 = dma.hbm_to_vmem [thread:$0]  %s2, 1024, %s158, [#allocation7], 64, 64, 4
        $region20: #{tpu_custom_call.1} parent=11 // pred_fallthru
          _
        // Predicated region
        $region21: #{tpu_custom_call.1} parent=11 // pred_check
          %p164 = pneg %p107
        $region22: #{tpu_custom_call.1} parent=11 // pred_check_branch
          %166 = sbr.rel (%p164) target = $region24
        $region23: #{tpu_custom_call.1} parent=11 // pred_region
          _
        $region24: #{tpu_custom_call.1} parent=11 // pred_fallthru
          _
      $region12: #{tpu_custom_call.1} parent=5 // pred_fallthru
        _
      %p167 = scmp.lt.s32.totalorder %s18, 8
      // Predicated region
      $region25: #{tpu_custom_call.1} parent=5 // pred_check
        %p168 = pneg %p167
      $region26: #{tpu_custom_call.1} parent=5 // pred_check_branch
        %170 = sbr.rel (%p168) target = $region28
      $region27: #{tpu_custom_call.1} parent=5 // pred_region
        // Predicated region
        $region29: #{tpu_custom_call.1} parent=27 // pred_check
          %p171 = pneg %p59
        $region30: #{tpu_custom_call.1} parent=27 // pred_check_branch
          %173 = sbr.rel (%p171) target = $region32
        $region31: #{tpu_custom_call.1} parent=27 // pred_region
          %s174 = sand.u32 %s49, 1
          %s175 = scalar_lea.sflag [#allocation4], %s174
          %s176 = sand.u32 %s49, 1
          %s177 = smul.addr %s176, 128
          %s178 = scalar_lea.vmem [#allocation3], %s177
          %s179 = smul.u32 16, %s18
          %s181 = ssub.s32 2048, 2048
          %182 = vsyncadd %s175, %s181
          %s183 = smul.addr %s179, 128
          %s184 = scalar_lea.hbm %s1, %s183
          %s185 = sshll.u32 %s178, 4
          %s186 = int_to_ptr.vmem [resolvable:$true] %s185
          %191 = dma.hbm_to_vmem [thread:$0]  %s184, 2048, %s186, %s175, 128, 128, 8
        $region32: #{tpu_custom_call.1} parent=27 // pred_fallthru
          _
      $region28: #{tpu_custom_call.1} parent=5 // pred_fallthru
        _
      %p192 = scmp.le.s32.totalorder 1, %s18
      %p193 = scmp.lt.s32.totalorder %s18, 9
      %p194 = pnand %p192, %p193
      %p195 = pneg %p194
      // Predicated region
      $region33: #{tpu_custom_call.1} parent=5 // pred_check
        _
      $region34: #{tpu_custom_call.1} parent=5 // pred_check_branch
        %197 = sbr.rel (%p194) target = $region36
      $region35: #{tpu_custom_call.1} parent=5 // pred_region
        %s198 = ssub.s32 %s18, 1
        %s199 = sand.u32 %s52, 1
        %s200 = scalar_lea.sflag [#allocation4], %s199
        %s201 = sand.u32 %s52, 1
        %s202 = smul.addr %s201, 128
        %s203 = scalar_lea.vmem [#allocation3], %s202
        // Predicated region
        $region37: #{tpu_custom_call.1} parent=35 // pred_check
          %p204 = pneg %p65
        $region38: #{tpu_custom_call.1} parent=35 // pred_check_branch
          %206 = sbr.rel (%p204) target = $region40
        $region39: #{tpu_custom_call.1} parent=35 // pred_region
          %207 = dma.done %s200, 2048
        $region40: #{tpu_custom_call.1} parent=35 // pred_fallthru
          _
        // Predicated region
        $region41: #{tpu_custom_call.1} parent=35 // pred_check
          %p208 = pneg %p86
        $region42: #{tpu_custom_call.1} parent=35 // pred_check_branch
          %210 = sbr.rel (%p208) target = $region44
        $region43: #{tpu_custom_call.1} parent=35 // pred_region
          %211 = dma.done [#allocation7], 1024
        $region44: #{tpu_custom_call.1} parent=35 // pred_fallthru
          _
        %p212 = pneg %p39
        %p213 = pneg %p36
        %s214 = sand.u32 %s52, 1
        %s215 = scalar_lea.sflag [#allocation4], %s214
        %s216 = sand.u32 %s52, 1
        %s217 = smul.addr %s216, 128
        %s218 = scalar_lea.vmem [#allocation3], %s217
        %p219 = pneg %p65
        %p220 = pneg %p62
        %p221 = pneg %p86
        %p222 = pneg %p83
        %p223 = pneg %p107
        %p224 = pneg %p104
        %p225 = pneg %p133
        %p226 = pneg %p130
        %s227 = sand.u32 %s120, 1
        %s228 = scalar_lea.sflag [#allocation5], %s227
        %s229 = sand.u32 %s120, 1
        %s230 = smul.addr %s229, 128
        %s231 = scalar_lea.vmem [#allocation8], %s230
        %s232 = smul.u32 16, %s23
        %s233 = smul.u32 16, %s23
        %v235 = vld [vmem:[%s203] sm:$0xff]
        %v236 = vld [vmem:[%s203 + $0x8] sm:$0xff]
        %v237 = vld [vmem:[%s203 + $0x10] sm:$0xff]
        %v238 = vld [vmem:[%s203 + $0x18] sm:$0xff]
        %v239 = vld [vmem:[%s203 + $0x20] sm:$0xff]
        %v240 = vld [vmem:[%s203 + $0x28] sm:$0xff]
        %v241 = vld [vmem:[%s203 + $0x30] sm:$0xff]
        %v242 = vld [vmem:[%s203 + $0x38] sm:$0xff]
        %v243 = vld [vmem:[%s203 + $0x40] sm:$0xff]
        %v244 = vld [vmem:[%s203 + $0x48] sm:$0xff]
        %v245 = vld [vmem:[%s203 + $0x50] sm:$0xff]
        %v246 = vld [vmem:[%s203 + $0x58] sm:$0xff]
        %v247 = vld [vmem:[%s203 + $0x60] sm:$0xff]
        %v248 = vld [vmem:[%s203 + $0x68] sm:$0xff]
        %v249 = vld [vmem:[%s203 + $0x70] sm:$0xff]
        %v250 = vld [vmem:[%s203 + $0x78] sm:$0xff]
        %251 = vadd.xlane.f32.xlu0 %v235
        %v252 = vpop.xlane.xlu0 %251
        %253 = vadd.xlane.f32.xlu0 %v236
        %v254 = vpop.xlane.xlu0 %253
        %255 = vadd.xlane.f32.xlu0 %v237
        %v256 = vpop.xlane.xlu0 %255
        %257 = vadd.xlane.f32.xlu0 %v238
        %v258 = vpop.xlane.xlu0 %257
        %259 = vadd.xlane.f32.xlu0 %v239
        %v260 = vpop.xlane.xlu0 %259
        %261 = vadd.xlane.f32.xlu0 %v240
        %v262 = vpop.xlane.xlu0 %261
        %263 = vadd.xlane.f32.xlu0 %v241
        %v264 = vpop.xlane.xlu0 %263
        %265 = vadd.xlane.f32.xlu0 %v242
        %v266 = vpop.xlane.xlu0 %265
        %267 = vadd.xlane.f32.xlu0 %v243
        %v268 = vpop.xlane.xlu0 %267
        %269 = vadd.xlane.f32.xlu0 %v244
        %v270 = vpop.xlane.xlu0 %269
        %271 = vadd.xlane.f32.xlu0 %v245
        %v272 = vpop.xlane.xlu0 %271
        %273 = vadd.xlane.f32.xlu0 %v246
        %v274 = vpop.xlane.xlu0 %273
        %275 = vadd.xlane.f32.xlu0 %v247
        %v276 = vpop.xlane.xlu0 %275
        %277 = vadd.xlane.f32.xlu0 %v248
        %v278 = vpop.xlane.xlu0 %277
        %279 = vadd.xlane.f32.xlu0 %v249
        %v280 = vpop.xlane.xlu0 %279
        %281 = vadd.xlane.f32.xlu0 %v250
        %v282 = vpop.xlane.xlu0 %281
        %v283 = vmul.f32 %v235, %v235
        %v284 = vmul.f32 %v236, %v236
        %v285 = vmul.f32 %v237, %v237
        %v286 = vmul.f32 %v238, %v238
        %v287 = vmul.f32 %v239, %v239
        %v288 = vmul.f32 %v240, %v240
        %v289 = vmul.f32 %v241, %v241
        %v290 = vmul.f32 %v242, %v242
        %v291 = vmul.f32 %v243, %v243
        %v292 = vmul.f32 %v244, %v244
        %v293 = vmul.f32 %v245, %v245
        %v294 = vmul.f32 %v246, %v246
        %v295 = vmul.f32 %v247, %v247
        %v296 = vmul.f32 %v248, %v248
        %v297 = vmul.f32 %v249, %v249
        %v298 = vmul.f32 %v250, %v250
        %299 = vadd.xlane.f32.xlu0 %v283
        %v300 = vpop.xlane.xlu0 %299
        %301 = vadd.xlane.f32.xlu0 %v284
        %v302 = vpop.xlane.xlu0 %301
        %303 = vadd.xlane.f32.xlu0 %v285
        %v304 = vpop.xlane.xlu0 %303
        %305 = vadd.xlane.f32.xlu0 %v286
        %v306 = vpop.xlane.xlu0 %305
        %307 = vadd.xlane.f32.xlu0 %v287
        %v308 = vpop.xlane.xlu0 %307
        %309 = vadd.xlane.f32.xlu0 %v288
        %v310 = vpop.xlane.xlu0 %309
        %311 = vadd.xlane.f32.xlu0 %v289
        %v312 = vpop.xlane.xlu0 %311
        %313 = vadd.xlane.f32.xlu0 %v290
        %v314 = vpop.xlane.xlu0 %313
        %315 = vadd.xlane.f32.xlu0 %v291
        %v316 = vpop.xlane.xlu0 %315
        %317 = vadd.xlane.f32.xlu0 %v292
        %v318 = vpop.xlane.xlu0 %317
        %319 = vadd.xlane.f32.xlu0 %v293
        %v320 = vpop.xlane.xlu0 %319
        %321 = vadd.xlane.f32.xlu0 %v294
        %v322 = vpop.xlane.xlu0 %321
        %323 = vadd.xlane.f32.xlu0 %v295
        %v324 = vpop.xlane.xlu0 %323
        %325 = vadd.xlane.f32.xlu0 %v296
        %v326 = vpop.xlane.xlu0 %325
        %327 = vadd.xlane.f32.xlu0 %v297
        %v328 = vpop.xlane.xlu0 %327
        %329 = vadd.xlane.f32.xlu0 %v298
        %v330 = vpop.xlane.xlu0 %329
        %v331 = vmul.f32 %v252, 0.0078125
        %v332 = vmul.f32 %v254, 0.0078125
        %v333 = vmul.f32 %v256, 0.0078125
        %v334 = vmul.f32 %v258, 0.0078125
        %v335 = vmul.f32 %v260, 0.0078125
        %v336 = vmul.f32 %v262, 0.0078125
        %v337 = vmul.f32 %v264, 0.0078125
        %v338 = vmul.f32 %v266, 0.0078125
        %v339 = vmul.f32 %v268, 0.0078125
        %v340 = vmul.f32 %v270, 0.0078125
        %v341 = vmul.f32 %v272, 0.0078125
        %v342 = vmul.f32 %v274, 0.0078125
        %v343 = vmul.f32 %v276, 0.0078125
        %v344 = vmul.f32 %v278, 0.0078125
        %v345 = vmul.f32 %v280, 0.0078125
        %v346 = vmul.f32 %v282, 0.0078125
        %v347 = vmul.f32 %v331, %v331
        %v348 = vmul.f32 %v332, %v332
        %v349 = vmul.f32 %v333, %v333
        %v350 = vmul.f32 %v334, %v334
        %v351 = vmul.f32 %v335, %v335
        %v352 = vmul.f32 %v336, %v336
        %v353 = vmul.f32 %v337, %v337
        %v354 = vmul.f32 %v338, %v338
        %v355 = vmul.f32 %v339, %v339
        %v356 = vmul.f32 %v340, %v340
        %v357 = vmul.f32 %v341, %v341
        %v358 = vmul.f32 %v342, %v342
        %v359 = vmul.f32 %v343, %v343
        %v360 = vmul.f32 %v344, %v344
        %v361 = vmul.f32 %v345, %v345
        %v362 = vmul.f32 %v346, %v346
        %v363 = vmul.f32 %v347, 128.0
        %v364 = vmul.f32 %v348, 128.0
        %v365 = vmul.f32 %v349, 128.0
        %v366 = vmul.f32 %v350, 128.0
        %v367 = vmul.f32 %v351, 128.0
        %v368 = vmul.f32 %v352, 128.0
        %v369 = vmul.f32 %v353, 128.0
        %v370 = vmul.f32 %v354, 128.0
        %v371 = vmul.f32 %v355, 128.0
        %v372 = vmul.f32 %v356, 128.0
        %v373 = vmul.f32 %v357, 128.0
        %v374 = vmul.f32 %v358, 128.0
        %v375 = vmul.f32 %v359, 128.0
        %v376 = vmul.f32 %v360, 128.0
        %v377 = vmul.f32 %v361, 128.0
        %v378 = vmul.f32 %v362, 128.0
        %v379 = vsub.f32 %v300, %v363
        %v380 = vsub.f32 %v302, %v364
        %v381 = vsub.f32 %v304, %v365
        %v382 = vsub.f32 %v306, %v366
        %v383 = vsub.f32 %v308, %v367
        %v384 = vsub.f32 %v310, %v368
        %v385 = vsub.f32 %v312, %v369
        %v386 = vsub.f32 %v314, %v370
        %v387 = vsub.f32 %v316, %v371
        %v388 = vsub.f32 %v318, %v372
        %v389 = vsub.f32 %v320, %v373
        %v390 = vsub.f32 %v322, %v374
        %v391 = vsub.f32 %v324, %v375
        %v392 = vsub.f32 %v326, %v376
        %v393 = vsub.f32 %v328, %v377
        %v394 = vsub.f32 %v330, %v378
        %v395 = vmul.f32 %v379, 0.007874016
        %v396 = vmul.f32 %v380, 0.007874016
        %v397 = vmul.f32 %v381, 0.007874016
        %v398 = vmul.f32 %v382, 0.007874016
        %v399 = vmul.f32 %v383, 0.007874016
        %v400 = vmul.f32 %v384, 0.007874016
        %v401 = vmul.f32 %v385, 0.007874016
        %v402 = vmul.f32 %v386, 0.007874016
        %v403 = vmul.f32 %v387, 0.007874016
        %v404 = vmul.f32 %v388, 0.007874016
        %v405 = vmul.f32 %v389, 0.007874016
        %v406 = vmul.f32 %v390, 0.007874016
        %v407 = vmul.f32 %v391, 0.007874016
        %v408 = vmul.f32 %v392, 0.007874016
        %v409 = vmul.f32 %v393, 0.007874016
        %v410 = vmul.f32 %v394, 0.007874016
        %v411 = vmax.f32 %v395, 0.0
        %v412 = vmax.f32 %v396, 0.0
        %v413 = vmax.f32 %v397, 0.0
        %v414 = vmax.f32 %v398, 0.0
        %v415 = vmax.f32 %v399, 0.0
        %v416 = vmax.f32 %v400, 0.0
        %v417 = vmax.f32 %v401, 0.0
        %v418 = vmax.f32 %v402, 0.0
        %v419 = vmax.f32 %v403, 0.0
        %v420 = vmax.f32 %v404, 0.0
        %v421 = vmax.f32 %v405, 0.0
        %v422 = vmax.f32 %v406, 0.0
        %v423 = vmax.f32 %v407, 0.0
        %v424 = vmax.f32 %v408, 0.0
        %v425 = vmax.f32 %v409, 0.0
        %v426 = vmax.f32 %v410, 0.0
        %v427 = vrsqrt.pop %v411
        %v428 = vmul.f32 %v411, %v427
        %vm429 = vcmp.eq.f32.partialorder %v411, inf
        %v430 = vsel %vm429, %v411, %v428
        %vm431 = vcmp.eq.f32.partialorder %v411, 0.0
        %v432 = vand.u32 %v411, 2147483648
        %v433 = vsel %vm431, %v432, %v430
        %v434 = vrsqrt.pop %v412
        %v435 = vmul.f32 %v412, %v434
        %vm436 = vcmp.eq.f32.partialorder %v412, inf
        %v437 = vsel %vm436, %v412, %v435
        %vm438 = vcmp.eq.f32.partialorder %v412, 0.0
        %v439 = vand.u32 %v412, 2147483648
        %v440 = vsel %vm438, %v439, %v437
        %v441 = vrsqrt.pop %v413
        %v442 = vmul.f32 %v413, %v441
        %vm443 = vcmp.eq.f32.partialorder %v413, inf
        %v444 = vsel %vm443, %v413, %v442
        %vm445 = vcmp.eq.f32.partialorder %v413, 0.0
        %v446 = vand.u32 %v413, 2147483648
        %v447 = vsel %vm445, %v446, %v444
        %v448 = vrsqrt.pop %v414
        %v449 = vmul.f32 %v414, %v448
        %vm450 = vcmp.eq.f32.partialorder %v414, inf
        %v451 = vsel %vm450, %v414, %v449
        %vm452 = vcmp.eq.f32.partialorder %v414, 0.0
        %v453 = vand.u32 %v414, 2147483648
        %v454 = vsel %vm452, %v453, %v451
        %v455 = vrsqrt.pop %v415
        %v456 = vmul.f32 %v415, %v455
        %vm457 = vcmp.eq.f32.partialorder %v415, inf
        %v458 = vsel %vm457, %v415, %v456
        %vm459 = vcmp.eq.f32.partialorder %v415, 0.0
        %v460 = vand.u32 %v415, 2147483648
        %v461 = vsel %vm459, %v460, %v458
        %v462 = vrsqrt.pop %v416
        %v463 = vmul.f32 %v416, %v462
        %vm464 = vcmp.eq.f32.partialorder %v416, inf
        %v465 = vsel %vm464, %v416, %v463
        %vm466 = vcmp.eq.f32.partialorder %v416, 0.0
        %v467 = vand.u32 %v416, 2147483648
        %v468 = vsel %vm466, %v467, %v465
        %v469 = vrsqrt.pop %v417
        %v470 = vmul.f32 %v417, %v469
        %vm471 = vcmp.eq.f32.partialorder %v417, inf
        %v472 = vsel %vm471, %v417, %v470
        %vm473 = vcmp.eq.f32.partialorder %v417, 0.0
        %v474 = vand.u32 %v417, 2147483648
        %v475 = vsel %vm473, %v474, %v472
        %v476 = vrsqrt.pop %v418
        %v477 = vmul.f32 %v418, %v476
        %vm478 = vcmp.eq.f32.partialorder %v418, inf
        %v479 = vsel %vm478, %v418, %v477
        %vm480 = vcmp.eq.f32.partialorder %v418, 0.0
        %v481 = vand.u32 %v418, 2147483648
        %v482 = vsel %vm480, %v481, %v479
        %v483 = vrsqrt.pop %v419
        %v484 = vmul.f32 %v419, %v483
        %vm485 = vcmp.eq.f32.partialorder %v419, inf
        %v486 = vsel %vm485, %v419, %v484
        %vm487 = vcmp.eq.f32.partialorder %v419, 0.0
        %v488 = vand.u32 %v419, 2147483648
        %v489 = vsel %vm487, %v488, %v486
        %v490 = vrsqrt.pop %v420
        %v491 = vmul.f32 %v420, %v490
        %vm492 = vcmp.eq.f32.partialorder %v420, inf
        %v493 = vsel %vm492, %v420, %v491
        %vm494 = vcmp.eq.f32.partialorder %v420, 0.0
        %v495 = vand.u32 %v420, 2147483648
        %v496 = vsel %vm494, %v495, %v493
        %v497 = vrsqrt.pop %v421
        %v498 = vmul.f32 %v421, %v497
        %vm499 = vcmp.eq.f32.partialorder %v421, inf
        %v500 = vsel %vm499, %v421, %v498
        %vm501 = vcmp.eq.f32.partialorder %v421, 0.0
        %v502 = vand.u32 %v421, 2147483648
        %v503 = vsel %vm501, %v502, %v500
        %v504 = vrsqrt.pop %v422
        %v505 = vmul.f32 %v422, %v504
        %vm506 = vcmp.eq.f32.partialorder %v422, inf
        %v507 = vsel %vm506, %v422, %v505
        %vm508 = vcmp.eq.f32.partialorder %v422, 0.0
        %v509 = vand.u32 %v422, 2147483648
        %v510 = vsel %vm508, %v509, %v507
        %v511 = vrsqrt.pop %v423
        %v512 = vmul.f32 %v423, %v511
        %vm513 = vcmp.eq.f32.partialorder %v423, inf
        %v514 = vsel %vm513, %v423, %v512
        %vm515 = vcmp.eq.f32.partialorder %v423, 0.0
        %v516 = vand.u32 %v423, 2147483648
        %v517 = vsel %vm515, %v516, %v514
        %v518 = vrsqrt.pop %v424
        %v519 = vmul.f32 %v424, %v518
        %vm520 = vcmp.eq.f32.partialorder %v424, inf
        %v521 = vsel %vm520, %v424, %v519
        %vm522 = vcmp.eq.f32.partialorder %v424, 0.0
        %v523 = vand.u32 %v424, 2147483648
        %v524 = vsel %vm522, %v523, %v521
        %v525 = vrsqrt.pop %v425
        %v526 = vmul.f32 %v425, %v525
        %vm527 = vcmp.eq.f32.partialorder %v425, inf
        %v528 = vsel %vm527, %v425, %v526
        %vm529 = vcmp.eq.f32.partialorder %v425, 0.0
        %v530 = vand.u32 %v425, 2147483648
        %v531 = vsel %vm529, %v530, %v528
        %v532 = vrsqrt.pop %v426
        %v533 = vmul.f32 %v426, %v532
        %vm534 = vcmp.eq.f32.partialorder %v426, inf
        %v535 = vsel %vm534, %v426, %v533
        %vm536 = vcmp.eq.f32.partialorder %v426, 0.0
        %v537 = vand.u32 %v426, 2147483648
        %v538 = vsel %vm536, %v537, %v535
        %s539 = sld [smem:[#allocation2]]
        %v540 = vadd.f32 %v433, 1e-06
        %v541 = vadd.f32 %v440, 1e-06
        %v542 = vadd.f32 %v447, 1e-06
        %v543 = vadd.f32 %v454, 1e-06
        %v544 = vadd.f32 %v461, 1e-06
        %v545 = vadd.f32 %v468, 1e-06
        %v546 = vadd.f32 %v475, 1e-06
        %v547 = vadd.f32 %v482, 1e-06
        %v548 = vadd.f32 %v489, 1e-06
        %v549 = vadd.f32 %v496, 1e-06
        %v550 = vadd.f32 %v503, 1e-06
        %v551 = vadd.f32 %v510, 1e-06
        %v552 = vadd.f32 %v517, 1e-06
        %v553 = vadd.f32 %v524, 1e-06
        %v554 = vadd.f32 %v531, 1e-06
        %v555 = vadd.f32 %v538, 1e-06
        %v556 = vstv %s539
        %v557 = vrcp.pop %v540
        %v558 = vmul.f32 %v556, %v557
        %v559 = vrcp.pop %v541
        %v560 = vmul.f32 %v556, %v559
        %v561 = vrcp.pop %v542
        %v562 = vmul.f32 %v556, %v561
        %v563 = vrcp.pop %v543
        %v564 = vmul.f32 %v556, %v563
        %v565 = vrcp.pop %v544
        %v566 = vmul.f32 %v556, %v565
        %v567 = vrcp.pop %v545
        %v568 = vmul.f32 %v556, %v567
        %v569 = vrcp.pop %v546
        %v570 = vmul.f32 %v556, %v569
        %v571 = vrcp.pop %v547
        %v572 = vmul.f32 %v556, %v571
        %v573 = vrcp.pop %v548
        %v574 = vmul.f32 %v556, %v573
        %v575 = vrcp.pop %v549
        %v576 = vmul.f32 %v556, %v575
        %v577 = vrcp.pop %v550
        %v578 = vmul.f32 %v556, %v577
        %v579 = vrcp.pop %v551
        %v580 = vmul.f32 %v556, %v579
        %v581 = vrcp.pop %v552
        %v582 = vmul.f32 %v556, %v581
        %v583 = vrcp.pop %v553
        %v584 = vmul.f32 %v556, %v583
        %v585 = vrcp.pop %v554
        %v586 = vmul.f32 %v556, %v585
        %v587 = vrcp.pop %v555
        %v588 = vmul.f32 %v556, %v587
        %v589 = vsub.f32 %v235, %v331
        %v590 = vsub.f32 %v236, %v332
        %v591 = vsub.f32 %v237, %v333
        %v592 = vsub.f32 %v238, %v334
        %v593 = vsub.f32 %v239, %v335
        %v594 = vsub.f32 %v240, %v336
        %v595 = vsub.f32 %v241, %v337
        %v596 = vsub.f32 %v242, %v338
        %v597 = vsub.f32 %v243, %v339
        %v598 = vsub.f32 %v244, %v340
        %v599 = vsub.f32 %v245, %v341
        %v600 = vsub.f32 %v246, %v342
        %v601 = vsub.f32 %v247, %v343
        %v602 = vsub.f32 %v248, %v344
        %v603 = vsub.f32 %v249, %v345
        %v604 = vsub.f32 %v250, %v346
        %v605 = vmul.f32 %v589, %v558
        %v606 = vmul.f32 %v590, %v560
        %v607 = vmul.f32 %v591, %v562
        %v608 = vmul.f32 %v592, %v564
        %v609 = vmul.f32 %v593, %v566
        %v610 = vmul.f32 %v594, %v568
        %v611 = vmul.f32 %v595, %v570
        %v612 = vmul.f32 %v596, %v572
        %v613 = vmul.f32 %v597, %v574
        %v614 = vmul.f32 %v598, %v576
        %v615 = vmul.f32 %v599, %v578
        %v616 = vmul.f32 %v600, %v580
        %v617 = vmul.f32 %v601, %v582
        %v618 = vmul.f32 %v602, %v584
        %v619 = vmul.f32 %v603, %v586
        %v620 = vmul.f32 %v604, %v588
        %v621 = vpack.c.bf16 %v606, %v605
        %v622 = vpack.c.bf16 %v608, %v607
        %v623 = vpack.c.bf16 %v610, %v609
        %v624 = vpack.c.bf16 %v612, %v611
        %v625 = vpack.c.bf16 %v614, %v613
        %v626 = vpack.c.bf16 %v616, %v615
        %v627 = vpack.c.bf16 %v618, %v617
        %v628 = vpack.c.bf16 %v620, %v619
        %v629 = vld [vmem:[#allocation6] sm:$0xf]
        %v630 = vld [vmem:[#allocation6 + $0x4] sm:$0xf]
        %v631 = vld [vmem:[#allocation6 + $0x8] sm:$0xf]
        %v632 = vld [vmem:[#allocation6 + $0xc] sm:$0xf]
        %v633 = vld [vmem:[#allocation6 + $0x10] sm:$0xf]
        %v634 = vld [vmem:[#allocation6 + $0x14] sm:$0xf]
        %v635 = vld [vmem:[#allocation6 + $0x18] sm:$0xf]
        %v636 = vld [vmem:[#allocation6 + $0x1c] sm:$0xf]
        %v637 = vld [vmem:[#allocation6 + $0x20] sm:$0xf]
        %v638 = vld [vmem:[#allocation6 + $0x24] sm:$0xf]
        %v639 = vld [vmem:[#allocation6 + $0x28] sm:$0xf]
        %v640 = vld [vmem:[#allocation6 + $0x2c] sm:$0xf]
        %v641 = vld [vmem:[#allocation6 + $0x30] sm:$0xf]
        %v642 = vld [vmem:[#allocation6 + $0x34] sm:$0xf]
        %v643 = vld [vmem:[#allocation6 + $0x38] sm:$0xf]
        %v644 = vld [vmem:[#allocation6 + $0x3c] sm:$0xf]
        %v645 = vld [vmem:[%s3] sm:$0x1]
        %v647 = vlaneseq
        %v648 = vshrl.u32 %v647, 7
        %v649 = vsub.s32 0, %v648
        %v650 = vrot.slane %v645, %v649
        %v668 = vunpack.c.l.b16 %v629
        %v669 = vunpack.c.l.b16 %v630
        %v670 = vunpack.c.l.b16 %v631
        %v671 = vunpack.c.l.b16 %v632
        %v672 = vunpack.c.l.b16 %v633
        %v673 = vunpack.c.l.b16 %v634
        %v674 = vunpack.c.l.b16 %v635
        %v675 = vunpack.c.l.b16 %v636
        %v676 = vunpack.c.l.b16 %v637
        %v677 = vunpack.c.l.b16 %v638
        %v678 = vunpack.c.l.b16 %v639
        %v679 = vunpack.c.l.b16 %v640
        %v680 = vunpack.c.l.b16 %v641
        %v681 = vunpack.c.l.b16 %v642
        %v682 = vunpack.c.l.b16 %v643
        %v683 = vunpack.c.l.b16 %v644
        %v684 = vpack.c.b16 %v669, %v668
        %v685 = vpack.c.b16 %v671, %v670
        %v686 = vpack.c.b16 %v673, %v672
        %v687 = vpack.c.b16 %v675, %v674
        %v688 = vpack.c.b16 %v677, %v676
        %v689 = vpack.c.b16 %v679, %v678
        %v690 = vpack.c.b16 %v681, %v680
        %v691 = vpack.c.b16 %v683, %v682
        %700 = vmatprep.subr.bf16.mxu0 0
        %701 = vmatpush1.bf16.msra.mxu0 %v691
        %702 = vmatprep.subr.bf16.mxu0 0
        %703 = vmatpush1.bf16.msra.mxu0 %v690
        %704 = vmatprep.subr.bf16.mxu0 0
        %705 = vmatpush1.bf16.msra.mxu0 %v689
        %706 = vmatprep.subr.bf16.mxu0 0
        %707 = vmatpush1.bf16.msra.mxu0 %v688
        %708 = vmatprep.subr.bf16.mxu0 0
        %709 = vmatpush1.bf16.msra.mxu0 %v687
        %710 = vmatprep.subr.bf16.mxu0 0
        %711 = vmatpush1.bf16.msra.mxu0 %v686
        %712 = vmatprep.subr.bf16.mxu0 0
        %713 = vmatpush1.bf16.msra.mxu0 %v685
        %714 = vmatprep.subr.bf16.mxu0 0
        %715 = vmatpush1.bf16.msra.mxu0 %v684
        %716 = vmatprep.subr.bf16.mxu0 0
        %717 = vmatpush2.bf16.msra.mxu0 0
        %718 = vmatprep.subr.bf16.mxu0 0
        %719 = vmatpush2.bf16.msra.mxu0 0
        %720 = vmatprep.subr.bf16.mxu0 0
        %721 = vmatpush2.bf16.msra.mxu0 0
        %722 = vmatprep.subr.bf16.mxu0 0
        %723 = vmatpush2.bf16.msra.mxu0 0
        %724 = vmatprep.subr.bf16.mxu0 0
        %725 = vmatpush2.bf16.msra.mxu0 0
        %726 = vmatprep.subr.bf16.mxu0 0
        %727 = vmatpush2.bf16.msra.mxu0 0
        %728 = vmatprep.subr.bf16.mxu0 0
        %729 = vmatpush2.bf16.msra.mxu0 0
        %730 = vmatprep.subr.bf16.mxu0 0
        %731 = vmatpush2.bf16.msra.mxu0 0
        %732 = vmatprep.mubr.bf16.mxu0 0
        %733 = vmatmul.mubr.bf16.gmra.mxu0 %v621
        %v734 = vpop.f32.mrf.mxu0
        %v735 = vadd.f32 %v650, %v734
        %v736 = vpop.f32.mrf.mxu0
        %v737 = vpop.f32.mrf.mxu0
        %v738 = vadd.f32 %v650, %v737
        %v739 = vpop.f32.mrf.mxu0
        %740 = vmatprep.mubr.bf16.mxu0 0
        %741 = vmatmul.mubr.bf16.gmra.mxu0 %v622
        %v742 = vpop.f32.mrf.mxu0
        %v743 = vadd.f32 %v650, %v742
        %v744 = vpop.f32.mrf.mxu0
        %v745 = vpop.f32.mrf.mxu0
        %v746 = vadd.f32 %v650, %v745
        %v747 = vpop.f32.mrf.mxu0
        %748 = vmatprep.mubr.bf16.mxu0 0
        %749 = vmatmul.mubr.bf16.gmra.mxu0 %v623
        %v750 = vpop.f32.mrf.mxu0
        %v751 = vadd.f32 %v650, %v750
        %v752 = vpop.f32.mrf.mxu0
        %v753 = vpop.f32.mrf.mxu0
        %v754 = vadd.f32 %v650, %v753
        %v755 = vpop.f32.mrf.mxu0
        %756 = vmatprep.mubr.bf16.mxu0 0
        %757 = vmatmul.mubr.bf16.gmra.mxu0 %v624
        %v758 = vpop.f32.mrf.mxu0
        %v759 = vadd.f32 %v650, %v758
        %v760 = vpop.f32.mrf.mxu0
        %v761 = vpop.f32.mrf.mxu0
        %v762 = vadd.f32 %v650, %v761
        %v763 = vpop.f32.mrf.mxu0
        %764 = vmatprep.mubr.bf16.mxu0 0
        %765 = vmatmul.mubr.bf16.gmra.mxu0 %v625
        %v766 = vpop.f32.mrf.mxu0
        %v767 = vadd.f32 %v650, %v766
        %v768 = vpop.f32.mrf.mxu0
        %v769 = vpop.f32.mrf.mxu0
        %v770 = vadd.f32 %v650, %v769
        %v771 = vpop.f32.mrf.mxu0
        %772 = vmatprep.mubr.bf16.mxu0 0
        %773 = vmatmul.mubr.bf16.gmra.mxu0 %v626
        %v774 = vpop.f32.mrf.mxu0
        %v775 = vadd.f32 %v650, %v774
        %v776 = vpop.f32.mrf.mxu0
        %v777 = vpop.f32.mrf.mxu0
        %v778 = vadd.f32 %v650, %v777
        %v779 = vpop.f32.mrf.mxu0
        %780 = vmatprep.mubr.bf16.mxu0 0
        %781 = vmatmul.mubr.bf16.gmra.mxu0 %v627
        %v782 = vpop.f32.mrf.mxu0
        %v783 = vadd.f32 %v650, %v782
        %v784 = vpop.f32.mrf.mxu0
        %v785 = vpop.f32.mrf.mxu0
        %v786 = vadd.f32 %v650, %v785
        %v787 = vpop.f32.mrf.mxu0
        %788 = vmatprep.mubr.bf16.mxu0 0
        %789 = vmatmul.mubr.bf16.gmra.mxu0 %v628
        %v790 = vpop.f32.mrf.mxu0
        %v791 = vadd.f32 %v650, %v790
        %v792 = vpop.f32.mrf.mxu0
        %v793 = vpop.f32.mrf.mxu0
        %v794 = vadd.f32 %v650, %v793
        %v795 = vpop.f32.mrf.mxu0
        %796 = vdwg.mxu0
        %v797 = vadd.f32 %v235, %v735
        %v798 = vadd.f32 %v236, %v738
        %v799 = vadd.f32 %v237, %v743
        %v800 = vadd.f32 %v238, %v746
        %v801 = vadd.f32 %v239, %v751
        %v802 = vadd.f32 %v240, %v754
        %v803 = vadd.f32 %v241, %v759
        %v804 = vadd.f32 %v242, %v762
        %v805 = vadd.f32 %v243, %v767
        %v806 = vadd.f32 %v244, %v770
        %v807 = vadd.f32 %v245, %v775
        %v808 = vadd.f32 %v246, %v778
        %v809 = vadd.f32 %v247, %v783
        %v810 = vadd.f32 %v248, %v786
        %v811 = vadd.f32 %v249, %v791
        %v812 = vadd.f32 %v250, %v794
        %813 = vst [vmem:[%s231] sm:$0xff] %v797
        %814 = vst [vmem:[%s231 + $0x8] sm:$0xff] %v798
        %815 = vst [vmem:[%s231 + $0x10] sm:$0xff] %v799
        %816 = vst [vmem:[%s231 + $0x18] sm:$0xff] %v800
        %817 = vst [vmem:[%s231 + $0x20] sm:$0xff] %v801
        %818 = vst [vmem:[%s231 + $0x28] sm:$0xff] %v802
        %819 = vst [vmem:[%s231 + $0x30] sm:$0xff] %v803
        %820 = vst [vmem:[%s231 + $0x38] sm:$0xff] %v804
        %821 = vst [vmem:[%s231 + $0x40] sm:$0xff] %v805
        %822 = vst [vmem:[%s231 + $0x48] sm:$0xff] %v806
        %823 = vst [vmem:[%s231 + $0x50] sm:$0xff] %v807
        %824 = vst [vmem:[%s231 + $0x58] sm:$0xff] %v808
        %825 = vst [vmem:[%s231 + $0x60] sm:$0xff] %v809
        %826 = vst [vmem:[%s231 + $0x68] sm:$0xff] %v810
        %827 = vst [vmem:[%s231 + $0x70] sm:$0xff] %v811
        %828 = vst [vmem:[%s231 + $0x78] sm:$0xff] %v812
        %s829 = sand.u32 %s120, 1
        %s830 = scalar_lea.sflag [#allocation5], %s829
        %s831 = sand.u32 %s120, 1
        %s832 = smul.addr %s831, 128
        %s833 = scalar_lea.vmem [#allocation8], %s832
        // Predicated region
        $region45: #{tpu_custom_call.1} parent=35 // pred_check
          %p834 = pneg %p130
        $region46: #{tpu_custom_call.1} parent=35 // pred_check_branch
          %836 = sbr.rel (%p834) target = $region48
        $region47: #{tpu_custom_call.1} parent=35 // pred_region
          %s837 = smul.u32 16, %s23
          %s839 = ssub.s32 2048, 2048
          %840 = vsyncadd %s830, %s839
          %s841 = smul.addr %s837, 128
          %s842 = scalar_lea.hbm %s4, %s841
          %s843 = sshll.u32 %s833, 4
          %s844 = int_to_ptr.vmem [resolvable:$true] %s843
          %849 = dma.vmem_to_hbm [thread:$0]  %s844, 2048, %s842, %s830, 128, 128, 8
        $region48: #{tpu_custom_call.1} parent=35 // pred_fallthru
          _
      $region36: #{tpu_custom_call.1} parent=5 // pred_fallthru
        _
      %p850 = scmp.le.s32.totalorder 2, %s18
      // Predicated region
      $region49: #{tpu_custom_call.1} parent=5 // pred_check
        %p851 = pneg %p850
      $region50: #{tpu_custom_call.1} parent=5 // pred_check_branch
        %853 = sbr.rel (%p851) target = $region52
      $region51: #{tpu_custom_call.1} parent=5 // pred_region
        %s854 = ssub.s32 %s18, 2
        // Predicated region
        $region53: #{tpu_custom_call.1} parent=51 // pred_check
          %p855 = pneg %p136
        $region54: #{tpu_custom_call.1} parent=51 // pred_check_branch
          %857 = sbr.rel (%p855) target = $region56
        $region55: #{tpu_custom_call.1} parent=51 // pred_region
          %s858 = sand.u32 %s121, 1
          %s859 = scalar_lea.sflag [#allocation5], %s858
          %s860 = sand.u32 %s121, 1
          %s861 = smul.addr %s860, 128
          %s862 = scalar_lea.vmem [#allocation8], %s861
          %863 = dma.done %s859, 2048
        $region56: #{tpu_custom_call.1} parent=51 // pred_fallthru
          _
      $region52: #{tpu_custom_call.1} parent=5 // pred_fallthru
        _
    $region6: #{tpu_custom_call.1} parent=1 // loop_footer
      %s22 = sadd.s32 1, %s18
    $region7: #{tpu_custom_call.1} parent=1 // loop_footer_branch
      %17 = sbr.rel target = $region3
    $region8: #{tpu_custom_call.1} parent=1 // loop_exit
      _
    %864 = vsyncpa [#allocation4], 1
    %s865 = scalar_lea.sflag [#allocation4], 1
    %866 = vsyncpa %s865, 1
    %867 = vsyncpa [#allocation7], 1
    %868 = vsyncpa [#allocation5], 1
    %s869 = scalar_lea.sflag [#allocation5], 1
    %870 = vsyncpa %s869, 1

</llo_original>
